<compile_context>
chip_gen: v6e
topology: v6e:2x2x1
jax: 0.10.0
libtpu: 0.0.40
codegen_flags: <defaults>
</compile_context>

<pallas_src>
import functools

import jax
import jax.numpy as jnp
from jax.experimental import pallas as pl
from jax.experimental.pallas import tpu as pltpu

_LANE = 128
_SUBLANE = 8
_MAX_TILE_B = 512


def _round_up(n, m):
    return ((n + m - 1) // m) * m


def _linear_kernel(x_ref, w_ref, b_ref, o_ref):
    # Cast activations to bf16 on the fly (VPU work, hidden under the DMA);
    # single MXU matmul with f32 accumulation; bias add in f32.
    x_bf16 = x_ref[...].astype(jnp.bfloat16)
    acc = jnp.dot(x_bf16, w_ref[...], preferred_element_type=jnp.float32)
    o_ref[...] = (acc + b_ref[...]).astype(o_ref.dtype)


def _batch_tiling(batch):
    """Pick (padded_batch, tile_b) with padded_batch % tile_b == 0."""
    bp8 = _round_up(max(batch, 1), _SUBLANE)
    if bp8 <= 64:
        # Toy batches: a single small tile (megacore irrelevant at this size).
        return bp8, bp8
    if bp8 <= 2 * _MAX_TILE_B:
        # Mid-size batches: two tiles so the "parallel" grid axis can shard
        # across both TensorCores on v7x.
        tile_b = _round_up(pl.cdiv(bp8, 2), _SUBLANE)
        return 2 * tile_b, tile_b
    # Large batches: fixed 512-row tiles; pad the batch up to a tile multiple.
    return _round_up(bp8, _MAX_TILE_B), _MAX_TILE_B


def prepare_params(w, b):
    """One-time pad/cast of the nn.Linear params (do NOT call per step).

    w: [D, K] -> bf16 [D, Kp]; b: [K] -> f32 [1, Kp]; Kp = round_up(K, 128).
    """
    D, K = w.shape
    Kp = _round_up(K, _LANE)
    w_p = jnp.zeros((D, Kp), jnp.bfloat16).at[:, :K].set(w.astype(jnp.bfloat16))
    b_p = (jnp.zeros((1, Kp), jnp.float32)
           .at[:, :K].set(jnp.asarray(b).reshape(1, K).astype(jnp.float32)))
    return w_p, b_p


@functools.partial(jax.jit, static_argnames=("out_dim",))
def logistic_regression_forward(x, w_p, b_p, *, out_dim):
    """Equivalent of LogisticRegressionModel.forward: out = x @ W + b.

    x: [B, D]; w_p: [D, Kp] bf16; b_p: [1, Kp] f32 (from prepare_params).
    Returns [B, out_dim] float32.
    """
    B, D = x.shape
    Kp = w_p.shape[1]

    Bp, tile_b = _batch_tiling(B)
    # Pad the batch only when necessary (no copy at all for aligned batches).
    x_in = x if Bp == B else jnp.zeros((Bp, D), x.dtype).at[:B].set(x)
    grid = (Bp // tile_b,)

    x_bytes = jnp.dtype(x.dtype).itemsize
    # Double-buffered VMEM footprint of the pipeline; only raise the scoped
    # limit when it would exceed v5e's conservative 16 MiB default.
    vmem_est = (2 * tile_b * D * x_bytes           # x tiles
                + 2 * D * Kp * 2 + 2 * Kp * 4      # W / b (constant blocks)
                + 2 * tile_b * Kp * 4)             # output tiles
    vmem_limit = None
    if vmem_est > 12 * 1024 * 1024:
        # TODO(synk): for very large D, add a reduction grid axis over D with
        # an f32 accumulator scratch instead of one resident (D, Kp) block.
        vmem_limit = min(int(vmem_est * 2), 48 * 1024 * 1024)

    cost = pl.CostEstimate(
        flops=2 * Bp * D * Kp,
        transcendentals=0,
        bytes_accessed=Bp * D * x_bytes + D * Kp * 2 + Kp * 4 + Bp * Kp * 4,
    )

    out_p = pl.pallas_call(
        _linear_kernel,
        out_shape=jax.ShapeDtypeStruct((Bp, Kp), jnp.float32),
        grid_spec=pltpu.PrefetchScalarGridSpec(
            num_scalar_prefetch=0,
            grid=grid,
            in_specs=[
                pl.BlockSpec((tile_b, D), lambda i: (i, 0)),  # x row tile
                pl.BlockSpec((D, Kp), lambda i: (0, 0)),      # W (resident)
                pl.BlockSpec((1, Kp), lambda i: (0, 0)),      # bias (resident)
            ],
            out_specs=pl.BlockSpec((tile_b, Kp), lambda i: (i, 0)),
        ),
        compiler_params=pltpu.CompilerParams(
            dimension_semantics=("parallel",),
            vmem_limit_bytes=vmem_limit,
        ),
        cost_estimate=cost,
    )(x_in, w_p, b_p)

    # Strip batch / lane padding (stays inside this jit around the call).
    return out_p[:B, :out_dim]


def init_params(key, input_dim, output_dim):
    """nn.Linear-style uniform init; weight stored as [input_dim, output_dim]."""
    kw, kb = jax.random.split(key)
    lim = 1.0 / jnp.sqrt(input_dim)
    w = jax.random.uniform(kw, (input_dim, output_dim), jnp.float32, -lim, lim)
    b = jax.random.uniform(kb, (output_dim,), jnp.float32, -lim, lim)
    return w, b


if __name__ == "__main__":
    key = jax.random.PRNGKey(0)
    kx, kp = jax.random.split(key)

    # Small shapes consistent with the module: x is [batch, input_dim].
    B, input_dim, output_dim = 2, 1024, 10

    x = jax.random.normal(kx, (B, input_dim), dtype=jnp.float32)
    w, b = init_params(kp, input_dim, output_dim)

    # Pad/cast params once (per weight update), not per forward call.
    w_p, b_p = prepare_params(w, b)

    out = jax.block_until_ready(
        logistic_regression_forward(x, w_p, b_p, out_dim=output_dim))
    assert out.shape == (B, output_dim)
    assert out.dtype == jnp.float32

    # Reference 1: same bf16-input matmul in plain JAX (tight tolerance).
    ref_bf16 = jnp.dot(x.astype(jnp.bfloat16), w.astype(jnp.bfloat16),
                       preferred_element_type=jnp.float32) + b[None, :]
    assert jnp.allclose(out, ref_bf16, atol=1e-3, rtol=1e-3)

    # Reference 2: full-f32 reference (looser tolerance due to bf16 inputs).
    ref_f32 = x @ w + b[None, :]
    assert jnp.allclose(out, ref_f32, atol=5e-2, rtol=5e-2)

    print("KERNEL_OK")
</pallas_src>

<mosaic_0001>
module attributes {stable_mosaic.version = 11 : i64} {
  func.func @_linear_kernel(%arg0: i32, %arg1: memref<8x1024xf32, #tpu.memory_space<vmem>>, %arg2: memref<1024x128xbf16, #tpu.memory_space<vmem>>, %arg3: memref<1x128xf32, #tpu.memory_space<vmem>>, %arg4: memref<8x128xf32, #tpu.memory_space<vmem>>) attributes {dimension_semantics = [#tpu.dimension_semantics<parallel>], iteration_bounds = array<i64: 1>, scalar_prefetch = 0 : i64, scratch_operands = 0 : i64, tpu.core_type = #tpu.core_type<tc>, window_params = [{transform_indices = @transform_0, window_bounds = array<i64: 8, 1024>}, {pipeline_mode = #tpu.pipeline_mode<synchronous>, transform_indices = @transform_1, window_bounds = array<i64: 1024, 128>}, {pipeline_mode = #tpu.pipeline_mode<synchronous>, transform_indices = @transform_2, window_bounds = array<i64: 1, 128>}, {transform_indices = @transform_3, window_bounds = array<i64: 8, 128>}]} {
    %c0 = arith.constant 0 : index
    %c0_0 = arith.constant 0 : index
    %0 = vector.load %arg1[%c0, %c0_0] : memref<8x1024xf32, #tpu.memory_space<vmem>>, vector<8x1024xf32>
    %1 = arith.truncf %0 : vector<8x1024xf32> to vector<8x1024xbf16>
    %c0_1 = arith.constant 0 : index
    %c0_2 = arith.constant 0 : index
    %2 = vector.load %arg2[%c0_1, %c0_2] : memref<1024x128xbf16, #tpu.memory_space<vmem>>, vector<1024x128xbf16>
    %cst = arith.constant dense<0.000000e+00> : vector<8x128xf32>
    %3 = tpu.matmul %1, %2, %cst {dimension_numbers = #tpu.dot_dimension_numbers<[1], [0], [0], [1], [0, 0, 1, 1], [], []>} : vector<8x1024xbf16>, vector<1024x128xbf16>, vector<8x128xf32> -> vector<8x128xf32>
    %c0_3 = arith.constant 0 : index
    %c0_4 = arith.constant 0 : index
    %4 = vector.load %arg3[%c0_3, %c0_4] : memref<1x128xf32, #tpu.memory_space<vmem>>, vector<1x128xf32>
    %5 = vector.broadcast %4 : vector<1x128xf32> to vector<8x128xf32>
    %6 = arith.addf %3, %5 : vector<8x128xf32>
    %c0_5 = arith.constant 0 : index
    %c0_6 = arith.constant 0 : index
    %7 = vector.load %arg4[%c0_5, %c0_6] : memref<8x128xf32, #tpu.memory_space<vmem>>, vector<8x128xf32>
    tpu.vector_store %arg4[%c0_5, %c0_6], %6 {strides = array<i32>} : memref<8x128xf32, #tpu.memory_space<vmem>>, vector<8x128xf32>,
    return
  }
  func.func @transform_0(%arg0: i32) -> (i32, i32) {
    %c0_i32 = arith.constant 0 : i32
    %c0_i32_0 = arith.constant 0 : i32
    return %arg0, %c0_i32 : i32, i32
  }
  func.func @transform_1(%arg0: i32) -> (i32, i32) {
    %c0_i32 = arith.constant 0 : i32
    %c0_i32_0 = arith.constant 0 : i32
    %c0_i32_1 = arith.constant 0 : i32
    return %c0_i32, %c0_i32_0 : i32, i32
  }
  func.func @transform_2(%arg0: i32) -> (i32, i32) {
    %c0_i32 = arith.constant 0 : i32
    %c0_i32_0 = arith.constant 0 : i32
    %c0_i32_1 = arith.constant 0 : i32
    return %c0_i32, %c0_i32_0 : i32, i32
  }
  func.func @transform_3(%arg0: i32) -> (i32, i32) {
    %c0_i32 = arith.constant 0 : i32
    %c0_i32_0 = arith.constant 0 : i32
    return %arg0, %c0_i32 : i32, i32
  }
}

</mosaic_0001>

<llo_original>
// kernel: logistic_regression_forward.1
$region0: #{logistic_regression_forward.1}
  #allocation0 [shape = 'u32[]', space=smem, size = 0x4, offset = 0x4, fixed_abs, tag = 'smem constant byte address 0x4 - core index']
  #allocation1 [shape = 'u32[144,128]{1,0:T(1,128)}', space=vmem, size = 0x12000, scoped, tag = 'internal scratch']
  %s0 = inlined_call_operand.vmem [shape: f32[8,1024], index: 0, kind: input, shape index: {}]
  %s1 = inlined_call_operand.hbm [shape: bf16[1024,128], index: 1, kind: input, shape index: {}]
  %s2 = inlined_call_operand.vmem [shape: f32[1,128], index: 2, kind: input, shape index: {}]
  %s3 = inlined_call_operand.vmem [shape: f32[8,128], index: 3, kind: output, shape index: {}]
  %s4 = sld [smem:[#allocation0]]
  $region26: #{logistic_regression_forward.1} parent=0
    _
  %s6 = ssub.s32 1, %s4
  %s7 = scalar_select 0, %s6, %s4
  $region1: #{logistic_regression_forward.1} parent=0
    #allocation2 [shape = 'u8[262144]{0}', space=vmem, size = 0x40000, scoped, tag = 'input window, operand 1, single buffered']
    #allocation3 [shape = 's32[1]{0}', space=sflag, size = 0x4, scoped, tag = 'scoped memory for logistic_regression_forward.1']
    %8 = vsyncpa [#allocation3], 0
    // Predicated region
    $region2: #{logistic_regression_forward.1} parent=1 // pred_check
      _
    $region3: #{logistic_regression_forward.1} parent=1 // pred_check_branch
      %10 = sbr.rel (0) target = $region5
    $region4: #{logistic_regression_forward.1} parent=1 // pred_region
      _
    $region5: #{logistic_regression_forward.1} parent=1 // pred_fallthru
      _
    // Predicated region
    $region6: #{logistic_regression_forward.1} parent=1 // pred_check
      _
    $region7: #{logistic_regression_forward.1} parent=1 // pred_check_branch
      %12 = sbr.rel (0) target = $region9
    $region8: #{logistic_regression_forward.1} parent=1 // pred_region
      %s14 = ssub.s32 8192, 8192
      %15 = vsyncadd [#allocation3], %s14
      %s16 = sshll.u32 [#allocation2], 4
      %s17 = int_to_ptr.vmem [resolvable:$true] %s16
      %22 = dma.hbm_to_vmem [thread:$0]  %s1, 8192, %s17, [#allocation3], 64, 64, 4
    $region9: #{logistic_regression_forward.1} parent=1 // pred_fallthru
      _
    // Predicated region
    $region10: #{logistic_regression_forward.1} parent=1 // pred_check
      _
    $region11: #{logistic_regression_forward.1} parent=1 // pred_check_branch
      %24 = sbr.rel (0) target = $region13
    $region12: #{logistic_regression_forward.1} parent=1 // pred_region
      _
    $region13: #{logistic_regression_forward.1} parent=1 // pred_fallthru
      _
    // Predicated region
    $region14: #{logistic_regression_forward.1} parent=1 // pred_check
      _
    $region15: #{logistic_regression_forward.1} parent=1 // pred_check_branch
      %26 = sbr.rel (0) target = $region17
    $region16: #{logistic_regression_forward.1} parent=1 // pred_region
      %27 = dma.done [#allocation3], 8192
    $region17: #{logistic_regression_forward.1} parent=1 // pred_fallthru
      _
    %v29 = vld [vmem:[%s0] sm:$0xff]
    %v30 = vld [vmem:[%s0 + $0x8] sm:$0xff]
    %v31 = vld [vmem:[%s0 + $0x10] sm:$0xff]
    %v32 = vld [vmem:[%s0 + $0x18] sm:$0xff]
    %v33 = vld [vmem:[%s0 + $0x20] sm:$0xff]
    %v34 = vld [vmem:[%s0 + $0x28] sm:$0xff]
    %v35 = vld [vmem:[%s0 + $0x30] sm:$0xff]
    %v36 = vld [vmem:[%s0 + $0x38] sm:$0xff]
    %v37 = vpack.c.bf16 %v29, %v29
    %v38 = vpack.c.bf16 %v30, %v30
    %v39 = vpack.c.bf16 %v31, %v31
    %v40 = vpack.c.bf16 %v32, %v32
    %v41 = vpack.c.bf16 %v33, %v33
    %v42 = vpack.c.bf16 %v34, %v34
    %v43 = vpack.c.bf16 %v35, %v35
    %v44 = vpack.c.bf16 %v36, %v36
    %v45 = vld [vmem:[#allocation2] sm:$0xf]
    %v46 = vld [vmem:[#allocation2 + $0x4] sm:$0xf]
    %v47 = vld [vmem:[#allocation2 + $0x8] sm:$0xf]
    %v48 = vld [vmem:[#allocation2 + $0xc] sm:$0xf]
    %v49 = vld [vmem:[#allocation2 + $0x10] sm:$0xf]
    %v50 = vld [vmem:[#allocation2 + $0x14] sm:$0xf]
    %v51 = vld [vmem:[#allocation2 + $0x18] sm:$0xf]
    %v52 = vld [vmem:[#allocation2 + $0x1c] sm:$0xf]
    %v53 = vld [vmem:[#allocation2 + $0x20] sm:$0xf]
    %v54 = vld [vmem:[#allocation2 + $0x24] sm:$0xf]
    %v55 = vld [vmem:[#allocation2 + $0x28] sm:$0xf]
    %v56 = vld [vmem:[#allocation2 + $0x2c] sm:$0xf]
    %v57 = vld [vmem:[#allocation2 + $0x30] sm:$0xf]
    %v58 = vld [vmem:[#allocation2 + $0x34] sm:$0xf]
    %v59 = vld [vmem:[#allocation2 + $0x38] sm:$0xf]
    %v60 = vld [vmem:[#allocation2 + $0x3c] sm:$0xf]
    %v61 = vld [vmem:[#allocation2 + $0x40] sm:$0xf]
    %v62 = vld [vmem:[#allocation2 + $0x44] sm:$0xf]
    %v63 = vld [vmem:[#allocation2 + $0x48] sm:$0xf]
    %v64 = vld [vmem:[#allocation2 + $0x4c] sm:$0xf]
    %v65 = vld [vmem:[#allocation2 + $0x50] sm:$0xf]
    %v66 = vld [vmem:[#allocation2 + $0x54] sm:$0xf]
    %v67 = vld [vmem:[#allocation2 + $0x58] sm:$0xf]
    %v68 = vld [vmem:[#allocation2 + $0x5c] sm:$0xf]
    %v69 = vld [vmem:[#allocation2 + $0x60] sm:$0xf]
    %v70 = vld [vmem:[#allocation2 + $0x64] sm:$0xf]
    %v71 = vld [vmem:[#allocation2 + $0x68] sm:$0xf]
    %v72 = vld [vmem:[#allocation2 + $0x6c] sm:$0xf]
    %v73 = vld [vmem:[#allocation2 + $0x70] sm:$0xf]
    %v74 = vld [vmem:[#allocation2 + $0x74] sm:$0xf]
    %v75 = vld [vmem:[#allocation2 + $0x78] sm:$0xf]
    %v76 = vld [vmem:[#allocation2 + $0x7c] sm:$0xf]
    %v77 = vld [vmem:[#allocation2 + $0x80] sm:$0xf]
    %v78 = vld [vmem:[#allocation2 + $0x84] sm:$0xf]
    %v79 = vld [vmem:[#allocation2 + $0x88] sm:$0xf]
    %v80 = vld [vmem:[#allocation2 + $0x8c] sm:$0xf]
    %v81 = vld [vmem:[#allocation2 + $0x90] sm:$0xf]
    %v82 = vld [vmem:[#allocation2 + $0x94] sm:$0xf]
    %v83 = vld [vmem:[#allocation2 + $0x98] sm:$0xf]
    %v84 = vld [vmem:[#allocation2 + $0x9c] sm:$0xf]
    %v85 = vld [vmem:[#allocation2 + $0xa0] sm:$0xf]
    %v86 = vld [vmem:[#allocation2 + $0xa4] sm:$0xf]
    %v87 = vld [vmem:[#allocation2 + $0xa8] sm:$0xf]
    %v88 = vld [vmem:[#allocation2 + $0xac] sm:$0xf]
    %v89 = vld [vmem:[#allocation2 + $0xb0] sm:$0xf]
    %v90 = vld [vmem:[#allocation2 + $0xb4] sm:$0xf]
    %v91 = vld [vmem:[#allocation2 + $0xb8] sm:$0xf]
    %v92 = vld [vmem:[#allocation2 + $0xbc] sm:$0xf]
    %v93 = vld [vmem:[#allocation2 + $0xc0] sm:$0xf]
    %v94 = vld [vmem:[#allocation2 + $0xc4] sm:$0xf]
    %v95 = vld [vmem:[#allocation2 + $0xc8] sm:$0xf]
    %v96 = vld [vmem:[#allocation2 + $0xcc] sm:$0xf]
    %v97 = vld [vmem:[#allocation2 + $0xd0] sm:$0xf]
    %v98 = vld [vmem:[#allocation2 + $0xd4] sm:$0xf]
    %v99 = vld [vmem:[#allocation2 + $0xd8] sm:$0xf]
    %v100 = vld [vmem:[#allocation2 + $0xdc] sm:$0xf]
    %v101 = vld [vmem:[#allocation2 + $0xe0] sm:$0xf]
    %v102 = vld [vmem:[#allocation2 + $0xe4] sm:$0xf]
    %v103 = vld [vmem:[#allocation2 + $0xe8] sm:$0xf]
    %v104 = vld [vmem:[#allocation2 + $0xec] sm:$0xf]
    %v105 = vld [vmem:[#allocation2 + $0xf0] sm:$0xf]
    %v106 = vld [vmem:[#allocation2 + $0xf4] sm:$0xf]
    %v107 = vld [vmem:[#allocation2 + $0xf8] sm:$0xf]
    %v108 = vld [vmem:[#allocation2 + $0xfc] sm:$0xf]
    %v109 = vld [vmem:[#allocation2 + $0x100] sm:$0xf]
    %v110 = vld [vmem:[#allocation2 + $0x104] sm:$0xf]
    %v111 = vld [vmem:[#allocation2 + $0x108] sm:$0xf]
    %v112 = vld [vmem:[#allocation2 + $0x10c] sm:$0xf]
    %v113 = vld [vmem:[#allocation2 + $0x110] sm:$0xf]
    %v114 = vld [vmem:[#allocation2 + $0x114] sm:$0xf]
    %v115 = vld [vmem:[#allocation2 + $0x118] sm:$0xf]
    %v116 = vld [vmem:[#allocation2 + $0x11c] sm:$0xf]
    %v117 = vld [vmem:[#allocation2 + $0x120] sm:$0xf]
    %v118 = vld [vmem:[#allocation2 + $0x124] sm:$0xf]
    %v119 = vld [vmem:[#allocation2 + $0x128] sm:$0xf]
    %v120 = vld [vmem:[#allocation2 + $0x12c] sm:$0xf]
    %v121 = vld [vmem:[#allocation2 + $0x130] sm:$0xf]
    %v122 = vld [vmem:[#allocation2 + $0x134] sm:$0xf]
    %v123 = vld [vmem:[#allocation2 + $0x138] sm:$0xf]
    %v124 = vld [vmem:[#allocation2 + $0x13c] sm:$0xf]
    %v125 = vld [vmem:[#allocation2 + $0x140] sm:$0xf]
    %v126 = vld [vmem:[#allocation2 + $0x144] sm:$0xf]
    %v127 = vld [vmem:[#allocation2 + $0x148] sm:$0xf]
    %v128 = vld [vmem:[#allocation2 + $0x14c] sm:$0xf]
    %v129 = vld [vmem:[#allocation2 + $0x150] sm:$0xf]
    %v130 = vld [vmem:[#allocation2 + $0x154] sm:$0xf]
    %v131 = vld [vmem:[#allocation2 + $0x158] sm:$0xf]
    %v132 = vld [vmem:[#allocation2 + $0x15c] sm:$0xf]
    %v133 = vld [vmem:[#allocation2 + $0x160] sm:$0xf]
    %v134 = vld [vmem:[#allocation2 + $0x164] sm:$0xf]
    %v135 = vld [vmem:[#allocation2 + $0x168] sm:$0xf]
    %v136 = vld [vmem:[#allocation2 + $0x16c] sm:$0xf]
    %v137 = vld [vmem:[#allocation2 + $0x170] sm:$0xf]
    %v138 = vld [vmem:[#allocation2 + $0x174] sm:$0xf]
    %v139 = vld [vmem:[#allocation2 + $0x178] sm:$0xf]
    %v140 = vld [vmem:[#allocation2 + $0x17c] sm:$0xf]
    %v141 = vld [vmem:[#allocation2 + $0x180] sm:$0xf]
    %v142 = vld [vmem:[#allocation2 + $0x184] sm:$0xf]
    %v143 = vld [vmem:[#allocation2 + $0x188] sm:$0xf]
    %v144 = vld [vmem:[#allocation2 + $0x18c] sm:$0xf]
    %v145 = vld [vmem:[#allocation2 + $0x190] sm:$0xf]
    %v146 = vld [vmem:[#allocation2 + $0x194] sm:$0xf]
    %v147 = vld [vmem:[#allocation2 + $0x198] sm:$0xf]
    %v148 = vld [vmem:[#allocation2 + $0x19c] sm:$0xf]
    %v149 = vld [vmem:[#allocation2 + $0x1a0] sm:$0xf]
    %v150 = vld [vmem:[#allocation2 + $0x1a4] sm:$0xf]
    %v151 = vld [vmem:[#allocation2 + $0x1a8] sm:$0xf]
    %v152 = vld [vmem:[#allocation2 + $0x1ac] sm:$0xf]
    %v153 = vld [vmem:[#allocation2 + $0x1b0] sm:$0xf]
    %v154 = vld [vmem:[#allocation2 + $0x1b4] sm:$0xf]
    %v155 = vld [vmem:[#allocation2 + $0x1b8] sm:$0xf]
    %v156 = vld [vmem:[#allocation2 + $0x1bc] sm:$0xf]
    %v157 = vld [vmem:[#allocation2 + $0x1c0] sm:$0xf]
    %v158 = vld [vmem:[#allocation2 + $0x1c4] sm:$0xf]
    %v159 = vld [vmem:[#allocation2 + $0x1c8] sm:$0xf]
    %v160 = vld [vmem:[#allocation2 + $0x1cc] sm:$0xf]
    %v161 = vld [vmem:[#allocation2 + $0x1d0] sm:$0xf]
    %v162 = vld [vmem:[#allocation2 + $0x1d4] sm:$0xf]
    %v163 = vld [vmem:[#allocation2 + $0x1d8] sm:$0xf]
    %v164 = vld [vmem:[#allocation2 + $0x1dc] sm:$0xf]
    %v165 = vld [vmem:[#allocation2 + $0x1e0] sm:$0xf]
    %v166 = vld [vmem:[#allocation2 + $0x1e4] sm:$0xf]
    %v167 = vld [vmem:[#allocation2 + $0x1e8] sm:$0xf]
    %v168 = vld [vmem:[#allocation2 + $0x1ec] sm:$0xf]
    %v169 = vld [vmem:[#allocation2 + $0x1f0] sm:$0xf]
    %v170 = vld [vmem:[#allocation2 + $0x1f4] sm:$0xf]
    %v171 = vld [vmem:[#allocation2 + $0x1f8] sm:$0xf]
    %v172 = vld [vmem:[#allocation2 + $0x1fc] sm:$0xf]
    %v173 = vld [vmem:[%s2] sm:$0x1]
    %v175 = vlaneseq
    %v176 = vshrl.u32 %v175, 7
    %v177 = vsub.s32 0, %v176
    %v178 = vrot.slane %v173, %v177
    %v308 = vunpack.c.l.b16 %v45
    %v309 = vunpack.c.l.b16 %v46
    %v310 = vunpack.c.l.b16 %v47
    %v311 = vunpack.c.l.b16 %v48
    %v312 = vunpack.c.l.b16 %v49
    %v313 = vunpack.c.l.b16 %v50
    %v314 = vunpack.c.l.b16 %v51
    %v315 = vunpack.c.l.b16 %v52
    %v316 = vunpack.c.l.b16 %v53
    %v317 = vunpack.c.l.b16 %v54
    %v318 = vunpack.c.l.b16 %v55
    %v319 = vunpack.c.l.b16 %v56
    %v320 = vunpack.c.l.b16 %v57
    %v321 = vunpack.c.l.b16 %v58
    %v322 = vunpack.c.l.b16 %v59
    %v323 = vunpack.c.l.b16 %v60
    %v324 = vunpack.c.l.b16 %v61
    %v325 = vunpack.c.l.b16 %v62
    %v326 = vunpack.c.l.b16 %v63
    %v327 = vunpack.c.l.b16 %v64
    %v328 = vunpack.c.l.b16 %v65
    %v329 = vunpack.c.l.b16 %v66
    %v330 = vunpack.c.l.b16 %v67
    %v331 = vunpack.c.l.b16 %v68
    %v332 = vunpack.c.l.b16 %v69
    %v333 = vunpack.c.l.b16 %v70
    %v334 = vunpack.c.l.b16 %v71
    %v335 = vunpack.c.l.b16 %v72
    %v336 = vunpack.c.l.b16 %v73
    %v337 = vunpack.c.l.b16 %v74
    %v338 = vunpack.c.l.b16 %v75
    %v339 = vunpack.c.l.b16 %v76
    %v340 = vunpack.c.l.b16 %v77
    %v341 = vunpack.c.l.b16 %v78
    %v342 = vunpack.c.l.b16 %v79
    %v343 = vunpack.c.l.b16 %v80
    %v344 = vunpack.c.l.b16 %v81
    %v345 = vunpack.c.l.b16 %v82
    %v346 = vunpack.c.l.b16 %v83
    %v347 = vunpack.c.l.b16 %v84
    %v348 = vunpack.c.l.b16 %v85
    %v349 = vunpack.c.l.b16 %v86
    %v350 = vunpack.c.l.b16 %v87
    %v351 = vunpack.c.l.b16 %v88
    %v352 = vunpack.c.l.b16 %v89
    %v353 = vunpack.c.l.b16 %v90
    %v354 = vunpack.c.l.b16 %v91
    %v355 = vunpack.c.l.b16 %v92
    %v356 = vunpack.c.l.b16 %v93
    %v357 = vunpack.c.l.b16 %v94
    %v358 = vunpack.c.l.b16 %v95
    %v359 = vunpack.c.l.b16 %v96
    %v360 = vunpack.c.l.b16 %v97
    %v361 = vunpack.c.l.b16 %v98
    %v362 = vunpack.c.l.b16 %v99
    %v363 = vunpack.c.l.b16 %v100
    %v364 = vunpack.c.l.b16 %v101
    %v365 = vunpack.c.l.b16 %v102
    %v366 = vunpack.c.l.b16 %v103
    %v367 = vunpack.c.l.b16 %v104
    %v368 = vunpack.c.l.b16 %v105
    %v369 = vunpack.c.l.b16 %v106
    %v370 = vunpack.c.l.b16 %v107
    %v371 = vunpack.c.l.b16 %v108
    %v372 = vunpack.c.l.b16 %v109
    %v373 = vunpack.c.l.b16 %v110
    %v374 = vunpack.c.l.b16 %v111
    %v375 = vunpack.c.l.b16 %v112
    %v376 = vunpack.c.l.b16 %v113
    %v377 = vunpack.c.l.b16 %v114
    %v378 = vunpack.c.l.b16 %v115
    %v379 = vunpack.c.l.b16 %v116
    %v380 = vunpack.c.l.b16 %v117
    %v381 = vunpack.c.l.b16 %v118
    %v382 = vunpack.c.l.b16 %v119
    %v383 = vunpack.c.l.b16 %v120
    %v384 = vunpack.c.l.b16 %v121
    %v385 = vunpack.c.l.b16 %v122
    %v386 = vunpack.c.l.b16 %v123
    %v387 = vunpack.c.l.b16 %v124
    %v388 = vunpack.c.l.b16 %v125
    %v389 = vunpack.c.l.b16 %v126
    %v390 = vunpack.c.l.b16 %v127
    %v391 = vunpack.c.l.b16 %v128
    %v392 = vunpack.c.l.b16 %v129
    %v393 = vunpack.c.l.b16 %v130
    %v394 = vunpack.c.l.b16 %v131
    %v395 = vunpack.c.l.b16 %v132
    %v396 = vunpack.c.l.b16 %v133
    %v397 = vunpack.c.l.b16 %v134
    %v398 = vunpack.c.l.b16 %v135
    %v399 = vunpack.c.l.b16 %v136
    %v400 = vunpack.c.l.b16 %v137
    %v401 = vunpack.c.l.b16 %v138
    %v402 = vunpack.c.l.b16 %v139
    %v403 = vunpack.c.l.b16 %v140
    %v404 = vunpack.c.l.b16 %v141
    %v405 = vunpack.c.l.b16 %v142
    %v406 = vunpack.c.l.b16 %v143
    %v407 = vunpack.c.l.b16 %v144
    %v408 = vunpack.c.l.b16 %v145
    %v409 = vunpack.c.l.b16 %v146
    %v410 = vunpack.c.l.b16 %v147
    %v411 = vunpack.c.l.b16 %v148
    %v412 = vunpack.c.l.b16 %v149
    %v413 = vunpack.c.l.b16 %v150
    %v414 = vunpack.c.l.b16 %v151
    %v415 = vunpack.c.l.b16 %v152
    %v416 = vunpack.c.l.b16 %v153
    %v417 = vunpack.c.l.b16 %v154
    %v418 = vunpack.c.l.b16 %v155
    %v419 = vunpack.c.l.b16 %v156
    %v420 = vunpack.c.l.b16 %v157
    %v421 = vunpack.c.l.b16 %v158
    %v422 = vunpack.c.l.b16 %v159
    %v423 = vunpack.c.l.b16 %v160
    %v424 = vunpack.c.l.b16 %v161
    %v425 = vunpack.c.l.b16 %v162
    %v426 = vunpack.c.l.b16 %v163
    %v427 = vunpack.c.l.b16 %v164
    %v428 = vunpack.c.l.b16 %v165
    %v429 = vunpack.c.l.b16 %v166
    %v430 = vunpack.c.l.b16 %v167
    %v431 = vunpack.c.l.b16 %v168
    %v432 = vunpack.c.l.b16 %v169
    %v433 = vunpack.c.l.b16 %v170
    %v434 = vunpack.c.l.b16 %v171
    %v435 = vunpack.c.l.b16 %v172
    %v436 = vpack.c.b16 %v309, %v308
    %v437 = vpack.c.b16 %v311, %v310
    %v438 = vpack.c.b16 %v313, %v312
    %v439 = vpack.c.b16 %v315, %v314
    %v440 = vpack.c.b16 %v317, %v316
    %v441 = vpack.c.b16 %v319, %v318
    %v442 = vpack.c.b16 %v321, %v320
    %v443 = vpack.c.b16 %v323, %v322
    %v444 = vpack.c.b16 %v325, %v324
    %v445 = vpack.c.b16 %v327, %v326
    %v446 = vpack.c.b16 %v329, %v328
    %v447 = vpack.c.b16 %v331, %v330
    %v448 = vpack.c.b16 %v333, %v332
    %v449 = vpack.c.b16 %v335, %v334
    %v450 = vpack.c.b16 %v337, %v336
    %v451 = vpack.c.b16 %v339, %v338
    %v452 = vpack.c.b16 %v341, %v340
    %v453 = vpack.c.b16 %v343, %v342
    %v454 = vpack.c.b16 %v345, %v344
    %v455 = vpack.c.b16 %v347, %v346
    %v456 = vpack.c.b16 %v349, %v348
    %v457 = vpack.c.b16 %v351, %v350
    %v458 = vpack.c.b16 %v353, %v352
    %v459 = vpack.c.b16 %v355, %v354
    %v460 = vpack.c.b16 %v357, %v356
    %v461 = vpack.c.b16 %v359, %v358
    %v462 = vpack.c.b16 %v361, %v360
    %v463 = vpack.c.b16 %v363, %v362
    %v464 = vpack.c.b16 %v365, %v364
    %v465 = vpack.c.b16 %v367, %v366
    %v466 = vpack.c.b16 %v369, %v368
    %v467 = vpack.c.b16 %v371, %v370
    %v468 = vpack.c.b16 %v373, %v372
    %v469 = vpack.c.b16 %v375, %v374
    %v470 = vpack.c.b16 %v377, %v376
    %v471 = vpack.c.b16 %v379, %v378
    %v472 = vpack.c.b16 %v381, %v380
    %v473 = vpack.c.b16 %v383, %v382
    %v474 = vpack.c.b16 %v385, %v384
    %v475 = vpack.c.b16 %v387, %v386
    %v476 = vpack.c.b16 %v389, %v388
    %v477 = vpack.c.b16 %v391, %v390
    %v478 = vpack.c.b16 %v393, %v392
    %v479 = vpack.c.b16 %v395, %v394
    %v480 = vpack.c.b16 %v397, %v396
    %v481 = vpack.c.b16 %v399, %v398
    %v482 = vpack.c.b16 %v401, %v400
    %v483 = vpack.c.b16 %v403, %v402
    %v484 = vpack.c.b16 %v405, %v404
    %v485 = vpack.c.b16 %v407, %v406
    %v486 = vpack.c.b16 %v409, %v408
    %v487 = vpack.c.b16 %v411, %v410
    %v488 = vpack.c.b16 %v413, %v412
    %v489 = vpack.c.b16 %v415, %v414
    %v490 = vpack.c.b16 %v417, %v416
    %v491 = vpack.c.b16 %v419, %v418
    %v492 = vpack.c.b16 %v421, %v420
    %v493 = vpack.c.b16 %v423, %v422
    %v494 = vpack.c.b16 %v425, %v424
    %v495 = vpack.c.b16 %v427, %v426
    %v496 = vpack.c.b16 %v429, %v428
    %v497 = vpack.c.b16 %v431, %v430
    %v498 = vpack.c.b16 %v433, %v432
    %v499 = vpack.c.b16 %v435, %v434
    %564 = vmatprep.subr.bf16.mxu0 0
    %565 = vmatpush1.bf16.msra.mxu0 %v443
    %566 = vmatprep.subr.bf16.mxu0 0
    %567 = vmatpush1.bf16.msra.mxu0 %v442
    %568 = vmatprep.subr.bf16.mxu0 0
    %569 = vmatpush1.bf16.msra.mxu0 %v441
    %570 = vmatprep.subr.bf16.mxu0 0
    %571 = vmatpush1.bf16.msra.mxu0 %v440
    %572 = vmatprep.subr.bf16.mxu0 0
    %573 = vmatpush1.bf16.msra.mxu0 %v439
    %574 = vmatprep.subr.bf16.mxu0 0
    %575 = vmatpush1.bf16.msra.mxu0 %v438
    %576 = vmatprep.subr.bf16.mxu0 0
    %577 = vmatpush1.bf16.msra.mxu0 %v437
    %578 = vmatprep.subr.bf16.mxu0 0
    %579 = vmatpush1.bf16.msra.mxu0 %v436
    %580 = vmatprep.subr.bf16.mxu0 0
    %581 = vmatpush2.bf16.msra.mxu0 %v451
    %582 = vmatprep.subr.bf16.mxu0 0
    %583 = vmatpush2.bf16.msra.mxu0 %v450
    %584 = vmatprep.subr.bf16.mxu0 0
    %585 = vmatpush2.bf16.msra.mxu0 %v449
    %586 = vmatprep.subr.bf16.mxu0 0
    %587 = vmatpush2.bf16.msra.mxu0 %v448
    %588 = vmatprep.subr.bf16.mxu0 0
    %589 = vmatpush2.bf16.msra.mxu0 %v447
    %590 = vmatprep.subr.bf16.mxu0 0
    %591 = vmatpush2.bf16.msra.mxu0 %v446
    %592 = vmatprep.subr.bf16.mxu0 0
    %593 = vmatpush2.bf16.msra.mxu0 %v445
    %594 = vmatprep.subr.bf16.mxu0 0
    %595 = vmatpush2.bf16.msra.mxu0 %v444
    %596 = vmatprep.mubr.bf16.mxu0 %v38
    %597 = vmatmul.mubr.bf16.gmra.mxu0 %v37
    %v598 = vpop.f32.mrf.mxu0
    %v599 = vadd.f32 %v178, %v598
    %v600 = vpop.f32.mrf.mxu0
    %v601 = vpop.f32.mrf.mxu0
    %v602 = vpop.f32.mrf.mxu0
    %603 = vdwg.mxu0
    %604 = vmatprep.subr.bf16.mxu0 0
    %605 = vmatpush1.bf16.msra.mxu0 %v459
    %606 = vmatprep.subr.bf16.mxu0 0
    %607 = vmatpush1.bf16.msra.mxu0 %v458
    %608 = vmatprep.subr.bf16.mxu0 0
    %609 = vmatpush1.bf16.msra.mxu0 %v457
    %610 = vmatprep.subr.bf16.mxu0 0
    %611 = vmatpush1.bf16.msra.mxu0 %v456
    %612 = vmatprep.subr.bf16.mxu0 0
    %613 = vmatpush1.bf16.msra.mxu0 %v455
    %614 = vmatprep.subr.bf16.mxu0 0
    %615 = vmatpush1.bf16.msra.mxu0 %v454
    %616 = vmatprep.subr.bf16.mxu0 0
    %617 = vmatpush1.bf16.msra.mxu0 %v453
    %618 = vmatprep.subr.bf16.mxu0 0
    %619 = vmatpush1.bf16.msra.mxu0 %v452
    %620 = vmatprep.subr.bf16.mxu0 0
    %621 = vmatpush2.bf16.msra.mxu0 %v467
    %622 = vmatprep.subr.bf16.mxu0 0
    %623 = vmatpush2.bf16.msra.mxu0 %v466
    %624 = vmatprep.subr.bf16.mxu0 0
    %625 = vmatpush2.bf16.msra.mxu0 %v465
    %626 = vmatprep.subr.bf16.mxu0 0
    %627 = vmatpush2.bf16.msra.mxu0 %v464
    %628 = vmatprep.subr.bf16.mxu0 0
    %629 = vmatpush2.bf16.msra.mxu0 %v463
    %630 = vmatprep.subr.bf16.mxu0 0
    %631 = vmatpush2.bf16.msra.mxu0 %v462
    %632 = vmatprep.subr.bf16.mxu0 0
    %633 = vmatpush2.bf16.msra.mxu0 %v461
    %634 = vmatprep.subr.bf16.mxu0 0
    %635 = vmatpush2.bf16.msra.mxu0 %v460
    %636 = vmatprep.mubr.bf16.mxu0 %v40
    %637 = vmatmul.mubr.bf16.gmra.mxu0 %v39
    %v638 = vpop.f32.mrf.mxu0
    %v639 = vadd.f32 %v599, %v638
    %v640 = vpop.f32.mrf.mxu0
    %v641 = vpop.f32.mrf.mxu0
    %v642 = vpop.f32.mrf.mxu0
    %643 = vdwg.mxu0
    %644 = vmatprep.subr.bf16.mxu0 0
    %645 = vmatpush1.bf16.msra.mxu0 %v475
    %646 = vmatprep.subr.bf16.mxu0 0
    %647 = vmatpush1.bf16.msra.mxu0 %v474
    %648 = vmatprep.subr.bf16.mxu0 0
    %649 = vmatpush1.bf16.msra.mxu0 %v473
    %650 = vmatprep.subr.bf16.mxu0 0
    %651 = vmatpush1.bf16.msra.mxu0 %v472
    %652 = vmatprep.subr.bf16.mxu0 0
    %653 = vmatpush1.bf16.msra.mxu0 %v471
    %654 = vmatprep.subr.bf16.mxu0 0
    %655 = vmatpush1.bf16.msra.mxu0 %v470
    %656 = vmatprep.subr.bf16.mxu0 0
    %657 = vmatpush1.bf16.msra.mxu0 %v469
    %658 = vmatprep.subr.bf16.mxu0 0
    %659 = vmatpush1.bf16.msra.mxu0 %v468
    %660 = vmatprep.subr.bf16.mxu0 0
    %661 = vmatpush2.bf16.msra.mxu0 %v483
    %662 = vmatprep.subr.bf16.mxu0 0
    %663 = vmatpush2.bf16.msra.mxu0 %v482
    %664 = vmatprep.subr.bf16.mxu0 0
    %665 = vmatpush2.bf16.msra.mxu0 %v481
    %666 = vmatprep.subr.bf16.mxu0 0
    %667 = vmatpush2.bf16.msra.mxu0 %v480
    %668 = vmatprep.subr.bf16.mxu0 0
    %669 = vmatpush2.bf16.msra.mxu0 %v479
    %670 = vmatprep.subr.bf16.mxu0 0
    %671 = vmatpush2.bf16.msra.mxu0 %v478
    %672 = vmatprep.subr.bf16.mxu0 0
    %673 = vmatpush2.bf16.msra.mxu0 %v477
    %674 = vmatprep.subr.bf16.mxu0 0
    %675 = vmatpush2.bf16.msra.mxu0 %v476
    %676 = vmatprep.mubr.bf16.mxu0 %v42
    %677 = vmatmul.mubr.bf16.gmra.mxu0 %v41
    %v678 = vpop.f32.mrf.mxu0
    %v679 = vadd.f32 %v639, %v678
    %v680 = vpop.f32.mrf.mxu0
    %v681 = vpop.f32.mrf.mxu0
    %v682 = vpop.f32.mrf.mxu0
    %683 = vdwg.mxu0
    %684 = vmatprep.subr.bf16.mxu0 0
    %685 = vmatpush1.bf16.msra.mxu0 %v491
    %686 = vmatprep.subr.bf16.mxu0 0
    %687 = vmatpush1.bf16.msra.mxu0 %v490
    %688 = vmatprep.subr.bf16.mxu0 0
    %689 = vmatpush1.bf16.msra.mxu0 %v489
    %690 = vmatprep.subr.bf16.mxu0 0
    %691 = vmatpush1.bf16.msra.mxu0 %v488
    %692 = vmatprep.subr.bf16.mxu0 0
    %693 = vmatpush1.bf16.msra.mxu0 %v487
    %694 = vmatprep.subr.bf16.mxu0 0
    %695 = vmatpush1.bf16.msra.mxu0 %v486
    %696 = vmatprep.subr.bf16.mxu0 0
    %697 = vmatpush1.bf16.msra.mxu0 %v485
    %698 = vmatprep.subr.bf16.mxu0 0
    %699 = vmatpush1.bf16.msra.mxu0 %v484
    %700 = vmatprep.subr.bf16.mxu0 0
    %701 = vmatpush2.bf16.msra.mxu0 %v499
    %702 = vmatprep.subr.bf16.mxu0 0
    %703 = vmatpush2.bf16.msra.mxu0 %v498
    %704 = vmatprep.subr.bf16.mxu0 0
    %705 = vmatpush2.bf16.msra.mxu0 %v497
    %706 = vmatprep.subr.bf16.mxu0 0
    %707 = vmatpush2.bf16.msra.mxu0 %v496
    %708 = vmatprep.subr.bf16.mxu0 0
    %709 = vmatpush2.bf16.msra.mxu0 %v495
    %710 = vmatprep.subr.bf16.mxu0 0
    %711 = vmatpush2.bf16.msra.mxu0 %v494
    %712 = vmatprep.subr.bf16.mxu0 0
    %713 = vmatpush2.bf16.msra.mxu0 %v493
    %714 = vmatprep.subr.bf16.mxu0 0
    %715 = vmatpush2.bf16.msra.mxu0 %v492
    %716 = vmatprep.mubr.bf16.mxu0 %v44
    %717 = vmatmul.mubr.bf16.gmra.mxu0 %v43
    %v718 = vpop.f32.mrf.mxu0
    %v719 = vadd.f32 %v679, %v718
    %v720 = vpop.f32.mrf.mxu0
    %v721 = vpop.f32.mrf.mxu0
    %v722 = vpop.f32.mrf.mxu0
    %723 = vdwg.mxu0
    %724 = vst [vmem:[%s3] sm:$0xff] %v719
    // Predicated region
    $region18: #{logistic_regression_forward.1} parent=1 // pred_check
      _
    $region19: #{logistic_regression_forward.1} parent=1 // pred_check_branch
      %726 = sbr.rel (0) target = $region21
    $region20: #{logistic_regression_forward.1} parent=1 // pred_region
      _
    $region21: #{logistic_regression_forward.1} parent=1 // pred_fallthru
      _
    // Predicated region
    $region22: #{logistic_regression_forward.1} parent=1 // pred_check
      _
    $region23: #{logistic_regression_forward.1} parent=1 // pred_check_branch
      %728 = sbr.rel (0) target = $region25
    $region24: #{logistic_regression_forward.1} parent=1 // pred_region
      _
    $region25: #{logistic_regression_forward.1} parent=1 // pred_fallthru
      _
    %729 = vsyncpa [#allocation3], 1

</llo_original>
